<compile_context>
chip_gen: v5e
topology: v5e:2x2
jax: 0.10.0
libtpu: 0.0.40
codegen_flags: <defaults>
</compile_context>

<pallas_src>
import jax
import jax.numpy as jnp
from jax.experimental import pallas as pl
from jax.experimental.pallas import tpu as pltpu

_LANE = 128     # lane width: last dim of every tile padded to a multiple of this
_SUBLANE = 8    # sublane width: batch padded to a multiple of this


def _round_up(n, m):
    return ((n + m - 1) // m) * m


def _make_gru_kernel(with_bias: bool):
    """Static specialization: bias / no-bias variants (no zeros DMA when bias=False)."""

    def kernel(*refs):
        if with_bias:
            h_ref, x_ref, wbig_ref, wh_ref, b_ref, h_out_ref = refs
        else:
            h_ref, x_ref, wbig_ref, wh_ref, h_out_ref = refs

        h = h_ref[...].astype(jnp.float32)          # (Bp, Hp)
        x = x_ref[...].astype(jnp.float32)          # (Bp, Ip)
        Hp = h_ref.shape[1]

        # Lane-aligned concat (both pieces are 128-multiples -> pure VMEM copies).
        hx = jnp.concatenate([h, x], axis=1)        # (Bp, Hp+Ip)

        # Single fused MXU pass: columns [z | r | candidate-x-part], K = Hp+Ip.
        pre = jnp.dot(hx, wbig_ref[...], preferred_element_type=jnp.float32)
        if with_bias:
            pre = pre + b_ref[...].astype(jnp.float32)   # (1, 3Hp) broadcast

        # Gate slices land on 128-lane block boundaries -> free slicing.
        z = jax.nn.sigmoid(pre[:, 0 * Hp:1 * Hp])
        r = jax.nn.sigmoid(pre[:, 1 * Hp:2 * Hp])
        cand = pre[:, 2 * Hp:3 * Hp]

        # Data-dependent half of the candidate: (r * h) @ W_h^T.
        cand = cand + jnp.dot(r * h, wh_ref[...],
                              preferred_element_type=jnp.float32)
        h_tilde = jnp.tanh(cand)

        h_new = (1.0 - z) * h + z * h_tilde
        h_out_ref[...] = h_new.astype(h_out_ref.dtype)

    return kernel


def pack_gru_weights(W_z, W_r, W, b_z=None, b_r=None, b=None,
                     param_dtype=jnp.float32):
    """One-time weight packing (do this OUTSIDE any time loop).

    W_z, W_r, W: (H, H+I), columns ordered [h-part | x-part] (cat order (prev_h, x)).
    Returns padded, transposed, fused weight blocks:
      W_big: (Hp+Ip, 3*Hp)  columns [z | r | candidate(x-part only)]
      W_h:   (Hp, Hp)       candidate h-part (applied to r*h)
      b:     (1, 3*Hp) or None
    """
    H, HI = W_z.shape
    I = HI - H
    Hp = _round_up(H, _LANE)
    Ip = _round_up(I, _LANE)

    Wz = W_z.astype(param_dtype)
    Wr = W_r.astype(param_dtype)
    Wc = W.astype(param_dtype)

    W_big = jnp.zeros((Hp + Ip, 3 * Hp), param_dtype)
    # z gate: rows 0:H act on h, rows Hp:Hp+I act on x.
    W_big = W_big.at[:H, 0:H].set(Wz[:, :H].T)
    W_big = W_big.at[Hp:Hp + I, 0:H].set(Wz[:, H:].T)
    # r gate
    W_big = W_big.at[:H, Hp:Hp + H].set(Wr[:, :H].T)
    W_big = W_big.at[Hp:Hp + I, Hp:Hp + H].set(Wr[:, H:].T)
    # candidate: only the x-part here; h-part goes through (r*h) @ W_h.
    W_big = W_big.at[Hp:Hp + I, 2 * Hp:2 * Hp + H].set(Wc[:, H:].T)

    W_h = jnp.zeros((Hp, Hp), param_dtype)
    W_h = W_h.at[:H, :H].set(Wc[:, :H].T)

    if b_z is not None:
        b_pack = jnp.zeros((1, 3 * Hp), param_dtype)
        b_pack = b_pack.at[0, 0:H].set(b_z.astype(param_dtype))
        b_pack = b_pack.at[0, Hp:Hp + H].set(b_r.astype(param_dtype))
        b_pack = b_pack.at[0, 2 * Hp:2 * Hp + H].set(b.astype(param_dtype))
    else:
        b_pack = None

    return {"W_big": W_big, "W_h": W_h, "b": b_pack,
            "H": H, "I": I, "Hp": Hp, "Ip": Ip}


def gru_cell(x, prev_state, packed):
    """Single GRU step.  x: (B, I); prev_state: (B, H) or None; packed: pack_gru_weights()."""
    B, I = x.shape
    H, Hp, Ip = packed["H"], packed["Hp"], packed["Ip"]
    assert I == packed["I"]

    if prev_state is None:
        prev_h = jnp.zeros((B, H), dtype=x.dtype)
    else:
        prev_h = prev_state
    Bp = _round_up(B, _SUBLANE)

    cdt = jnp.float32
    x_p = jnp.zeros((Bp, Ip), cdt).at[:B, :I].set(x.astype(cdt))
    h_p = jnp.zeros((Bp, Hp), cdt).at[:B, :H].set(prev_h.astype(cdt))

    with_bias = packed["b"] is not None
    kernel = _make_gru_kernel(with_bias)

    operands = [h_p, x_p, packed["W_big"], packed["W_h"]]
    if with_bias:
        operands.append(packed["b"])

    def full(shape):
        return pl.BlockSpec(shape, lambda *_: tuple(0 for _ in shape))

    h_new_p = pl.pallas_call(
        kernel,
        out_shape=jax.ShapeDtypeStruct((Bp, Hp), x.dtype),
        grid_spec=pltpu.PrefetchScalarGridSpec(
            num_scalar_prefetch=0,
            grid=(),  # whole (padded) problem fits in one VMEM tile at these sizes
            in_specs=[full(op.shape) for op in operands],
            out_specs=full((Bp, Hp)),
        ),
    )(*operands)
    return h_new_p[:B, :H]


def init_params(key, input_size, hidden_size, bias=False, dtype=jnp.float32):
    """Matches reset_parameters(): uniform(-sqrt(1/hidden_size), +sqrt(1/hidden_size))."""
    sqrt_k = (1.0 / hidden_size) ** 0.5
    ks = jax.random.split(key, 6)
    shape_w = (hidden_size, hidden_size + input_size)
    W_z = jax.random.uniform(ks[0], shape_w, dtype, -sqrt_k, sqrt_k)
    W_r = jax.random.uniform(ks[1], shape_w, dtype, -sqrt_k, sqrt_k)
    W = jax.random.uniform(ks[2], shape_w, dtype, -sqrt_k, sqrt_k)
    if bias:
        b_z = jax.random.uniform(ks[3], (hidden_size,), dtype, -sqrt_k, sqrt_k)
        b_r = jax.random.uniform(ks[4], (hidden_size,), dtype, -sqrt_k, sqrt_k)
        b = jax.random.uniform(ks[5], (hidden_size,), dtype, -sqrt_k, sqrt_k)
    else:
        b_z = b_r = b = None
    return W_z, W_r, W, b_z, b_r, b


def _reference(x, prev_h, W_z, W_r, W, b_z=None, b_r=None, b=None):
    """Pure-JAX transcription of the PyTorch forward()."""
    if prev_h is None:
        prev_h = jnp.zeros((x.shape[0], W_z.shape[0]), x.dtype)
    hx = jnp.concatenate([prev_h, x], axis=1)
    z_pre = hx @ W_z.T
    r_pre = hx @ W_r.T
    if b_z is not None:
        z_pre = z_pre + b_z
        r_pre = r_pre + b_r
    z = jax.nn.sigmoid(z_pre)
    r = jax.nn.sigmoid(r_pre)
    n_pre = jnp.concatenate([r * prev_h, x], axis=1) @ W.T
    if b is not None:
        n_pre = n_pre + b
    h_tilde = jnp.tanh(n_pre)
    return (1.0 - z) * prev_h + z * h_tilde


if __name__ == "__main__":
    key = jax.random.PRNGKey(0)
    batch, input_size, hidden_size = 4, 32, 32

    k_p, k_pb, k_x, k_h = jax.random.split(key, 4)
    x = jax.random.normal(k_x, (batch, input_size), jnp.float32)
    h0 = jax.random.normal(k_h, (batch, hidden_size), jnp.float32)

    # --- bias=False (module default) ---
    W_z, W_r, W, b_z, b_r, b = init_params(k_p, input_size, hidden_size, bias=False)
    packed = pack_gru_weights(W_z, W_r, W, b_z, b_r, b)

    h_new = gru_cell(x, h0, packed)
    jax.block_until_ready(h_new)
    h_ref = _reference(x, h0, W_z, W_r, W, b_z, b_r, b)
    assert jnp.allclose(h_new, h_ref, atol=1e-5, rtol=1e-4), \
        float(jnp.max(jnp.abs(h_new - h_ref)))

    # prev_state=None path (module zero-initializes the hidden state)
    h_new0 = gru_cell(x, None, packed)
    jax.block_until_ready(h_new0)
    h_ref0 = _reference(x, None, W_z, W_r, W, b_z, b_r, b)
    assert jnp.allclose(h_new0, h_ref0, atol=1e-5, rtol=1e-4)

    # --- bias=True variant ---
    W_z2, W_r2, W2, b_z2, b_r2, b2 = init_params(k_pb, input_size, hidden_size, bias=True)
    packed2 = pack_gru_weights(W_z2, W_r2, W2, b_z2, b_r2, b2)
    h_new2 = gru_cell(x, h0, packed2)
    jax.block_until_ready(h_new2)
    h_ref2 = _reference(x, h0, W_z2, W_r2, W2, b_z2, b_r2, b2)
    assert jnp.allclose(h_new2, h_ref2, atol=1e-5, rtol=1e-4)

    print("KERNEL_OK")
</pallas_src>

<mosaic_0001>
module attributes {stable_mosaic.version = 11 : i64} {
  func.func @kernel(%arg0: memref<8x128xf32, #tpu.memory_space<vmem>>, %arg1: memref<8x128xf32, #tpu.memory_space<vmem>>, %arg2: memref<256x384xf32, #tpu.memory_space<vmem>>, %arg3: memref<128x128xf32, #tpu.memory_space<vmem>>, %arg4: memref<8x128xf32, #tpu.memory_space<vmem>>) attributes {dimension_semantics = [], scalar_prefetch = 0 : i64, scratch_operands = 0 : i64, tpu.core_type = #tpu.core_type<tc>} {
    %c0 = arith.constant 0 : index
    %c0_0 = arith.constant 0 : index
    %0 = vector.load %arg0[%c0, %c0_0] : memref<8x128xf32, #tpu.memory_space<vmem>>, vector<8x128xf32>
    %c0_1 = arith.constant 0 : index
    %c0_2 = arith.constant 0 : index
    %1 = vector.load %arg1[%c0_1, %c0_2] : memref<8x128xf32, #tpu.memory_space<vmem>>, vector<8x128xf32>
    %2 = tpu.concatenate %0, %1 in 1 : vector<8x128xf32>, vector<8x128xf32> -> vector<8x256xf32>
    %c0_3 = arith.constant 0 : index
    %c0_4 = arith.constant 0 : index
    %3 = vector.load %arg2[%c0_3, %c0_4] : memref<256x384xf32, #tpu.memory_space<vmem>>, vector<256x384xf32>
    %cst = arith.constant dense<0.000000e+00> : vector<8x384xf32>
    %4 = tpu.matmul %2, %3, %cst {dimension_numbers = #tpu.dot_dimension_numbers<[1], [0], [0], [1], [0, 0, 1, 1], [], []>} : vector<8x256xf32>, vector<256x384xf32>, vector<8x384xf32> -> vector<8x384xf32>
    %5 = vector.extract_strided_slice %4 {offsets = [0, 0], sizes = [8, 128], strides = [1, 1]} : vector<8x384xf32> to vector<8x128xf32>
    %6 = arith.negf %5 : vector<8x128xf32>
    %7 = math.exp %6 : vector<8x128xf32>
    %cst_5 = arith.constant 1.000000e+00 : f32
    %8 = vector.broadcast %cst_5 : f32 to vector<8x128xf32>
    %9 = arith.addf %8, %7 : vector<8x128xf32>
    %10 = arith.divf %8, %9 : vector<8x128xf32>
    %11 = vector.extract_strided_slice %4 {offsets = [0, 128], sizes = [8, 128], strides = [1, 1]} : vector<8x384xf32> to vector<8x128xf32>
    %12 = arith.negf %11 : vector<8x128xf32>
    %13 = math.exp %12 : vector<8x128xf32>
    %cst_6 = arith.constant 1.000000e+00 : f32
    %14 = vector.broadcast %cst_6 : f32 to vector<8x128xf32>
    %15 = arith.addf %14, %13 : vector<8x128xf32>
    %16 = arith.divf %14, %15 : vector<8x128xf32>
    %17 = vector.extract_strided_slice %4 {offsets = [0, 256], sizes = [8, 128], strides = [1, 1]} : vector<8x384xf32> to vector<8x128xf32>
    %18 = arith.mulf %16, %0 : vector<8x128xf32>
    %c0_7 = arith.constant 0 : index
    %c0_8 = arith.constant 0 : index
    %19 = vector.load %arg3[%c0_7, %c0_8] : memref<128x128xf32, #tpu.memory_space<vmem>>, vector<128x128xf32>
    %cst_9 = arith.constant dense<0.000000e+00> : vector<8x128xf32>
    %20 = tpu.matmul %18, %19, %cst_9 {dimension_numbers = #tpu.dot_dimension_numbers<[1], [0], [0], [1], [0, 0, 1, 1], [], []>} : vector<8x128xf32>, vector<128x128xf32>, vector<8x128xf32> -> vector<8x128xf32>
    %21 = arith.addf %17, %20 : vector<8x128xf32>
    %22 = math.tanh %21 : vector<8x128xf32>
    %cst_10 = arith.constant 1.000000e+00 : f32
    %23 = vector.broadcast %cst_10 : f32 to vector<8x128xf32>
    %24 = arith.subf %23, %10 : vector<8x128xf32>
    %25 = arith.mulf %24, %0 : vector<8x128xf32>
    %26 = arith.mulf %10, %22 : vector<8x128xf32>
    %27 = arith.addf %25, %26 : vector<8x128xf32>
    %c0_11 = arith.constant 0 : index
    %c0_12 = arith.constant 0 : index
    %28 = vector.load %arg4[%c0_11, %c0_12] : memref<8x128xf32, #tpu.memory_space<vmem>>, vector<8x128xf32>
    tpu.vector_store %arg4[%c0_11, %c0_12], %27 {strides = array<i32>} : memref<8x128xf32, #tpu.memory_space<vmem>>, vector<8x128xf32>,
    return
  }
}

</mosaic_0001>

<llo_original>
// kernel: tpu_custom_call.1
$region0: #{tpu_custom_call.1}
  #allocation0 [shape = 'u32[]', space=smem, size = 0x4, offset = 0x4, fixed_abs, tag = 'smem constant byte address 0x4 - core index']
  #allocation1 [shape = 'u32[72,128]{1,0:T(1,128)}', space=vmem, size = 0x9000, scoped, tag = 'internal scratch']
  %s0 = inlined_call_operand.hbm [shape: f32[8,128], index: 0, kind: input, shape index: {}]
  %s1 = inlined_call_operand.hbm [shape: f32[8,128], index: 1, kind: input, shape index: {}]
  %s2 = inlined_call_operand.hbm [shape: f32[256,384], index: 2, kind: input, shape index: {}]
  %s3 = inlined_call_operand.hbm [shape: f32[128,128], index: 3, kind: input, shape index: {}]
  %s4 = inlined_call_operand.hbm [shape: f32[8,128], index: 4, kind: output, shape index: {}]
  %s5 = sld [smem:[#allocation0]]
  $region42: #{tpu_custom_call.1} parent=0
    _
  %s7 = ssub.s32 1, %s5
  %s8 = scalar_select 0, %s7, %s5
  $region1: #{tpu_custom_call.1} parent=0
    #allocation2 [shape = 'u8[4096]{0}', space=vmem, size = 0x1000, scoped, tag = 'input window, operand 0, single buffered']
    #allocation3 [shape = 's32[1]{0}', space=sflag, size = 0x4, scoped, tag = 'scoped memory for tpu_custom_call.1']
    #allocation4 [shape = 's32[1]{0}', space=sflag, size = 0x4, scoped, tag = 'scoped memory for tpu_custom_call.1']
    #allocation5 [shape = 'u8[4096]{0}', space=vmem, size = 0x1000, scoped, tag = 'input window, operand 1, single buffered']
    #allocation6 [shape = 's32[1]{0}', space=sflag, size = 0x4, scoped, tag = 'scoped memory for tpu_custom_call.1']
    #allocation7 [shape = 'u8[393216]{0}', space=vmem, size = 0x60000, scoped, tag = 'input window, operand 2, single buffered']
    #allocation8 [shape = 'u8[65536]{0}', space=vmem, size = 0x10000, scoped, tag = 'input window, operand 3, single buffered']
    #allocation9 [shape = 's32[1]{0}', space=sflag, size = 0x4, scoped, tag = 'scoped memory for tpu_custom_call.1']
    #allocation10 [shape = 'u8[4096]{0}', space=vmem, size = 0x1000, scoped, tag = 'output window, operand 0, single buffered']
    %9 = vsyncpa [#allocation3], 0
    %10 = vsyncpa [#allocation6], 0
    %11 = vsyncpa [#allocation9], 0
    %12 = vsyncpa [#allocation4], 0
    // Predicated region
    $region2: #{tpu_custom_call.1} parent=1 // pred_check
      _
    $region3: #{tpu_custom_call.1} parent=1 // pred_check_branch
      %14 = sbr.rel (0) target = $region5
    $region4: #{tpu_custom_call.1} parent=1 // pred_region
      %16 = vsyncadd [#allocation3], 0
      %s18 = sshll.u32 %s0, 4
      %s19 = int_to_ptr.hbm [resolvable:$true] %s18
      %s20 = sshll.u32 [#allocation2], 4
      %s21 = int_to_ptr.vmem [resolvable:$true] %s20
      %23 = dma.hbm_to_vmem [thread:$0]  %s19, 128, %s21, [#allocation3]
    $region5: #{tpu_custom_call.1} parent=1 // pred_fallthru
      _
    // Predicated region
    $region6: #{tpu_custom_call.1} parent=1 // pred_check
      _
    $region7: #{tpu_custom_call.1} parent=1 // pred_check_branch
      %25 = sbr.rel (0) target = $region9
    $region8: #{tpu_custom_call.1} parent=1 // pred_region
      %27 = vsyncadd [#allocation6], 0
      %s29 = sshll.u32 %s1, 4
      %s30 = int_to_ptr.hbm [resolvable:$true] %s29
      %s31 = sshll.u32 [#allocation5], 4
      %s32 = int_to_ptr.vmem [resolvable:$true] %s31
      %34 = dma.hbm_to_vmem [thread:$0]  %s30, 128, %s32, [#allocation6]
    $region9: #{tpu_custom_call.1} parent=1 // pred_fallthru
      _
    // Predicated region
    $region10: #{tpu_custom_call.1} parent=1 // pred_check
      _
    $region11: #{tpu_custom_call.1} parent=1 // pred_check_branch
      %36 = sbr.rel (0) target = $region13
    $region12: #{tpu_custom_call.1} parent=1 // pred_region
      %38 = vsyncadd [#allocation6], 0
      %s39 = sshll.u32 %s2, 4
      %s40 = int_to_ptr.hbm [resolvable:$true] %s39
      %s41 = sshll.u32 [#allocation7], 4
      %s42 = int_to_ptr.vmem [resolvable:$true] %s41
      %47 = dma.hbm_to_vmem [thread:$0]  %s40, 12288, %s42, [#allocation6], 384, 384, 24
    $region13: #{tpu_custom_call.1} parent=1 // pred_fallthru
      _
    // Predicated region
    $region14: #{tpu_custom_call.1} parent=1 // pred_check
      _
    $region15: #{tpu_custom_call.1} parent=1 // pred_check_branch
      %49 = sbr.rel (0) target = $region17
    $region16: #{tpu_custom_call.1} parent=1 // pred_region
      %51 = vsyncadd [#allocation9], 0
      %s52 = sshll.u32 %s3, 4
      %s53 = int_to_ptr.hbm [resolvable:$true] %s52
      %s54 = sshll.u32 [#allocation8], 4
      %s55 = int_to_ptr.vmem [resolvable:$true] %s54
      %60 = dma.hbm_to_vmem [thread:$0]  %s53, 2048, %s55, [#allocation9], 128, 128, 8
    $region17: #{tpu_custom_call.1} parent=1 // pred_fallthru
      _
    // Predicated region
    $region18: #{tpu_custom_call.1} parent=1 // pred_check
      _
    $region19: #{tpu_custom_call.1} parent=1 // pred_check_branch
      %62 = sbr.rel (0) target = $region21
    $region20: #{tpu_custom_call.1} parent=1 // pred_region
      %64 = dma.done [#allocation3], 128
    $region21: #{tpu_custom_call.1} parent=1 // pred_fallthru
      _
    // Predicated region
    $region22: #{tpu_custom_call.1} parent=1 // pred_check
      _
    $region23: #{tpu_custom_call.1} parent=1 // pred_check_branch
      %66 = sbr.rel (0) target = $region25
    $region24: #{tpu_custom_call.1} parent=1 // pred_region
      %68 = dma.done [#allocation6], 128
    $region25: #{tpu_custom_call.1} parent=1 // pred_fallthru
      _
    // Predicated region
    $region26: #{tpu_custom_call.1} parent=1 // pred_check
      _
    $region27: #{tpu_custom_call.1} parent=1 // pred_check_branch
      %70 = sbr.rel (0) target = $region29
    $region28: #{tpu_custom_call.1} parent=1 // pred_region
      %72 = dma.done [#allocation6], 12288
    $region29: #{tpu_custom_call.1} parent=1 // pred_fallthru
      _
    // Predicated region
    $region30: #{tpu_custom_call.1} parent=1 // pred_check
      _
    $region31: #{tpu_custom_call.1} parent=1 // pred_check_branch
      %74 = sbr.rel (0) target = $region33
    $region32: #{tpu_custom_call.1} parent=1 // pred_region
      %76 = dma.done [#allocation9], 2048
    $region33: #{tpu_custom_call.1} parent=1 // pred_fallthru
      _
    %v77 = vld [vmem:[#allocation2] sm:$0xff]
    %v78 = vld [vmem:[#allocation5] sm:$0xff]
    %v79 = vld [vmem:[#allocation7] sm:$0xff]
    %v80 = vld [vmem:[#allocation7 + $0x8] sm:$0xff]
    %v81 = vld [vmem:[#allocation7 + $0x10] sm:$0xff]
    %v82 = vld [vmem:[#allocation7 + $0x18] sm:$0xff]
    %v83 = vld [vmem:[#allocation7 + $0x20] sm:$0xff]
    %v84 = vld [vmem:[#allocation7 + $0x28] sm:$0xff]
    %v85 = vld [vmem:[#allocation7 + $0x30] sm:$0xff]
    %v86 = vld [vmem:[#allocation7 + $0x38] sm:$0xff]
    %v87 = vld [vmem:[#allocation7 + $0x40] sm:$0xff]
    %v88 = vld [vmem:[#allocation7 + $0x48] sm:$0xff]
    %v89 = vld [vmem:[#allocation7 + $0x50] sm:$0xff]
    %v90 = vld [vmem:[#allocation7 + $0x58] sm:$0xff]
    %v91 = vld [vmem:[#allocation7 + $0x60] sm:$0xff]
    %v92 = vld [vmem:[#allocation7 + $0x68] sm:$0xff]
    %v93 = vld [vmem:[#allocation7 + $0x70] sm:$0xff]
    %v94 = vld [vmem:[#allocation7 + $0x78] sm:$0xff]
    %v95 = vld [vmem:[#allocation7 + $0x80] sm:$0xff]
    %v96 = vld [vmem:[#allocation7 + $0x88] sm:$0xff]
    %v97 = vld [vmem:[#allocation7 + $0x90] sm:$0xff]
    %v98 = vld [vmem:[#allocation7 + $0x98] sm:$0xff]
    %v99 = vld [vmem:[#allocation7 + $0xa0] sm:$0xff]
    %v100 = vld [vmem:[#allocation7 + $0xa8] sm:$0xff]
    %v101 = vld [vmem:[#allocation7 + $0xb0] sm:$0xff]
    %v102 = vld [vmem:[#allocation7 + $0xb8] sm:$0xff]
    %v103 = vld [vmem:[#allocation7 + $0xc0] sm:$0xff]
    %v104 = vld [vmem:[#allocation7 + $0xc8] sm:$0xff]
    %v105 = vld [vmem:[#allocation7 + $0xd0] sm:$0xff]
    %v106 = vld [vmem:[#allocation7 + $0xd8] sm:$0xff]
    %v107 = vld [vmem:[#allocation7 + $0xe0] sm:$0xff]
    %v108 = vld [vmem:[#allocation7 + $0xe8] sm:$0xff]
    %v109 = vld [vmem:[#allocation7 + $0xf0] sm:$0xff]
    %v110 = vld [vmem:[#allocation7 + $0xf8] sm:$0xff]
    %v111 = vld [vmem:[#allocation7 + $0x100] sm:$0xff]
    %v112 = vld [vmem:[#allocation7 + $0x108] sm:$0xff]
    %v113 = vld [vmem:[#allocation7 + $0x110] sm:$0xff]
    %v114 = vld [vmem:[#allocation7 + $0x118] sm:$0xff]
    %v115 = vld [vmem:[#allocation7 + $0x120] sm:$0xff]
    %v116 = vld [vmem:[#allocation7 + $0x128] sm:$0xff]
    %v117 = vld [vmem:[#allocation7 + $0x130] sm:$0xff]
    %v118 = vld [vmem:[#allocation7 + $0x138] sm:$0xff]
    %v119 = vld [vmem:[#allocation7 + $0x140] sm:$0xff]
    %v120 = vld [vmem:[#allocation7 + $0x148] sm:$0xff]
    %v121 = vld [vmem:[#allocation7 + $0x150] sm:$0xff]
    %v122 = vld [vmem:[#allocation7 + $0x158] sm:$0xff]
    %v123 = vld [vmem:[#allocation7 + $0x160] sm:$0xff]
    %v124 = vld [vmem:[#allocation7 + $0x168] sm:$0xff]
    %v125 = vld [vmem:[#allocation7 + $0x170] sm:$0xff]
    %v126 = vld [vmem:[#allocation7 + $0x178] sm:$0xff]
    %v127 = vld [vmem:[#allocation7 + $0x180] sm:$0xff]
    %v128 = vld [vmem:[#allocation7 + $0x188] sm:$0xff]
    %v129 = vld [vmem:[#allocation7 + $0x190] sm:$0xff]
    %v130 = vld [vmem:[#allocation7 + $0x198] sm:$0xff]
    %v131 = vld [vmem:[#allocation7 + $0x1a0] sm:$0xff]
    %v132 = vld [vmem:[#allocation7 + $0x1a8] sm:$0xff]
    %v133 = vld [vmem:[#allocation7 + $0x1b0] sm:$0xff]
    %v134 = vld [vmem:[#allocation7 + $0x1b8] sm:$0xff]
    %v135 = vld [vmem:[#allocation7 + $0x1c0] sm:$0xff]
    %v136 = vld [vmem:[#allocation7 + $0x1c8] sm:$0xff]
    %v137 = vld [vmem:[#allocation7 + $0x1d0] sm:$0xff]
    %v138 = vld [vmem:[#allocation7 + $0x1d8] sm:$0xff]
    %v139 = vld [vmem:[#allocation7 + $0x1e0] sm:$0xff]
    %v140 = vld [vmem:[#allocation7 + $0x1e8] sm:$0xff]
    %v141 = vld [vmem:[#allocation7 + $0x1f0] sm:$0xff]
    %v142 = vld [vmem:[#allocation7 + $0x1f8] sm:$0xff]
    %v143 = vld [vmem:[#allocation7 + $0x200] sm:$0xff]
    %v144 = vld [vmem:[#allocation7 + $0x208] sm:$0xff]
    %v145 = vld [vmem:[#allocation7 + $0x210] sm:$0xff]
    %v146 = vld [vmem:[#allocation7 + $0x218] sm:$0xff]
    %v147 = vld [vmem:[#allocation7 + $0x220] sm:$0xff]
    %v148 = vld [vmem:[#allocation7 + $0x228] sm:$0xff]
    %v149 = vld [vmem:[#allocation7 + $0x230] sm:$0xff]
    %v150 = vld [vmem:[#allocation7 + $0x238] sm:$0xff]
    %v151 = vld [vmem:[#allocation7 + $0x240] sm:$0xff]
    %v152 = vld [vmem:[#allocation7 + $0x248] sm:$0xff]
    %v153 = vld [vmem:[#allocation7 + $0x250] sm:$0xff]
    %v154 = vld [vmem:[#allocation7 + $0x258] sm:$0xff]
    %v155 = vld [vmem:[#allocation7 + $0x260] sm:$0xff]
    %v156 = vld [vmem:[#allocation7 + $0x268] sm:$0xff]
    %v157 = vld [vmem:[#allocation7 + $0x270] sm:$0xff]
    %v158 = vld [vmem:[#allocation7 + $0x278] sm:$0xff]
    %v159 = vld [vmem:[#allocation7 + $0x280] sm:$0xff]
    %v160 = vld [vmem:[#allocation7 + $0x288] sm:$0xff]
    %v161 = vld [vmem:[#allocation7 + $0x290] sm:$0xff]
    %v162 = vld [vmem:[#allocation7 + $0x298] sm:$0xff]
    %v163 = vld [vmem:[#allocation7 + $0x2a0] sm:$0xff]
    %v164 = vld [vmem:[#allocation7 + $0x2a8] sm:$0xff]
    %v165 = vld [vmem:[#allocation7 + $0x2b0] sm:$0xff]
    %v166 = vld [vmem:[#allocation7 + $0x2b8] sm:$0xff]
    %v167 = vld [vmem:[#allocation7 + $0x2c0] sm:$0xff]
    %v168 = vld [vmem:[#allocation7 + $0x2c8] sm:$0xff]
    %v169 = vld [vmem:[#allocation7 + $0x2d0] sm:$0xff]
    %v170 = vld [vmem:[#allocation7 + $0x2d8] sm:$0xff]
    %v171 = vld [vmem:[#allocation7 + $0x2e0] sm:$0xff]
    %v172 = vld [vmem:[#allocation7 + $0x2e8] sm:$0xff]
    %v173 = vld [vmem:[#allocation7 + $0x2f0] sm:$0xff]
    %v174 = vld [vmem:[#allocation7 + $0x2f8] sm:$0xff]
    %175 = vmatpush.msra.mxu0 %v124
    %176 = vmatpush.msra.mxu0 %v121
    %177 = vmatpush.msra.mxu0 %v118
    %178 = vmatpush.msra.mxu0 %v115
    %179 = vmatpush.msra.mxu0 %v112
    %180 = vmatpush.msra.mxu0 %v109
    %181 = vmatpush.msra.mxu0 %v106
    %182 = vmatpush.msra.mxu0 %v103
    %183 = vmatpush.msra.mxu0 %v100
    %184 = vmatpush.msra.mxu0 %v97
    %185 = vmatpush.msra.mxu0 %v94
    %186 = vmatpush.msra.mxu0 %v91
    %187 = vmatpush.msra.mxu0 %v88
    %188 = vmatpush.msra.mxu0 %v85
    %189 = vmatpush.msra.mxu0 %v82
    %190 = vmatpush.msra.mxu0 %v79
    %191 = vmatmul.f32.gmra.mxu0 %v77
    %v192 = vpop.f32.mrf.mxu0
    %v193 = vadd.f32 0.0, %v192
    %194 = vdwg.mxu0
    %195 = vmatpush.msra.mxu0 %v172
    %196 = vmatpush.msra.mxu0 %v169
    %197 = vmatpush.msra.mxu0 %v166
    %198 = vmatpush.msra.mxu0 %v163
    %199 = vmatpush.msra.mxu0 %v160
    %200 = vmatpush.msra.mxu0 %v157
    %201 = vmatpush.msra.mxu0 %v154
    %202 = vmatpush.msra.mxu0 %v151
    %203 = vmatpush.msra.mxu0 %v148
    %204 = vmatpush.msra.mxu0 %v145
    %205 = vmatpush.msra.mxu0 %v142
    %206 = vmatpush.msra.mxu0 %v139
    %207 = vmatpush.msra.mxu0 %v136
    %208 = vmatpush.msra.mxu0 %v133
    %209 = vmatpush.msra.mxu0 %v130
    %210 = vmatpush.msra.mxu0 %v127
    %211 = vmatmul.f32.gmra.mxu0 %v78
    %v212 = vpop.f32.mrf.mxu0
    %v213 = vadd.f32 %v193, %v212
    %214 = vdwg.mxu0
    %215 = vmatpush.msra.mxu0 %v125
    %216 = vmatpush.msra.mxu0 %v122
    %217 = vmatpush.msra.mxu0 %v119
    %218 = vmatpush.msra.mxu0 %v116
    %219 = vmatpush.msra.mxu0 %v113
    %220 = vmatpush.msra.mxu0 %v110
    %221 = vmatpush.msra.mxu0 %v107
    %222 = vmatpush.msra.mxu0 %v104
    %223 = vmatpush.msra.mxu0 %v101
    %224 = vmatpush.msra.mxu0 %v98
    %225 = vmatpush.msra.mxu0 %v95
    %226 = vmatpush.msra.mxu0 %v92
    %227 = vmatpush.msra.mxu0 %v89
    %228 = vmatpush.msra.mxu0 %v86
    %229 = vmatpush.msra.mxu0 %v83
    %230 = vmatpush.msra.mxu0 %v80
    %231 = vmatmul.f32.gmra.mxu0 %v77
    %v232 = vpop.f32.mrf.mxu0
    %v233 = vadd.f32 0.0, %v232
    %234 = vdwg.mxu0
    %235 = vmatpush.msra.mxu0 %v173
    %236 = vmatpush.msra.mxu0 %v170
    %237 = vmatpush.msra.mxu0 %v167
    %238 = vmatpush.msra.mxu0 %v164
    %239 = vmatpush.msra.mxu0 %v161
    %240 = vmatpush.msra.mxu0 %v158
    %241 = vmatpush.msra.mxu0 %v155
    %242 = vmatpush.msra.mxu0 %v152
    %243 = vmatpush.msra.mxu0 %v149
    %244 = vmatpush.msra.mxu0 %v146
    %245 = vmatpush.msra.mxu0 %v143
    %246 = vmatpush.msra.mxu0 %v140
    %247 = vmatpush.msra.mxu0 %v137
    %248 = vmatpush.msra.mxu0 %v134
    %249 = vmatpush.msra.mxu0 %v131
    %250 = vmatpush.msra.mxu0 %v128
    %251 = vmatmul.f32.gmra.mxu0 %v78
    %v252 = vpop.f32.mrf.mxu0
    %v253 = vadd.f32 %v233, %v252
    %254 = vdwg.mxu0
    %255 = vmatpush.msra.mxu0 %v126
    %256 = vmatpush.msra.mxu0 %v123
    %257 = vmatpush.msra.mxu0 %v120
    %258 = vmatpush.msra.mxu0 %v117
    %259 = vmatpush.msra.mxu0 %v114
    %260 = vmatpush.msra.mxu0 %v111
    %261 = vmatpush.msra.mxu0 %v108
    %262 = vmatpush.msra.mxu0 %v105
    %263 = vmatpush.msra.mxu0 %v102
    %264 = vmatpush.msra.mxu0 %v99
    %265 = vmatpush.msra.mxu0 %v96
    %266 = vmatpush.msra.mxu0 %v93
    %267 = vmatpush.msra.mxu0 %v90
    %268 = vmatpush.msra.mxu0 %v87
    %269 = vmatpush.msra.mxu0 %v84
    %270 = vmatpush.msra.mxu0 %v81
    %271 = vmatmul.f32.gmra.mxu0 %v77
    %v272 = vpop.f32.mrf.mxu0
    %v273 = vadd.f32 0.0, %v272
    %274 = vdwg.mxu0
    %275 = vmatpush.msra.mxu0 %v174
    %276 = vmatpush.msra.mxu0 %v171
    %277 = vmatpush.msra.mxu0 %v168
    %278 = vmatpush.msra.mxu0 %v165
    %279 = vmatpush.msra.mxu0 %v162
    %280 = vmatpush.msra.mxu0 %v159
    %281 = vmatpush.msra.mxu0 %v156
    %282 = vmatpush.msra.mxu0 %v153
    %283 = vmatpush.msra.mxu0 %v150
    %284 = vmatpush.msra.mxu0 %v147
    %285 = vmatpush.msra.mxu0 %v144
    %286 = vmatpush.msra.mxu0 %v141
    %287 = vmatpush.msra.mxu0 %v138
    %288 = vmatpush.msra.mxu0 %v135
    %289 = vmatpush.msra.mxu0 %v132
    %290 = vmatpush.msra.mxu0 %v129
    %291 = vmatmul.f32.gmra.mxu0 %v78
    %v292 = vpop.f32.mrf.mxu0
    %v293 = vadd.f32 %v273, %v292
    %294 = vdwg.mxu0
    %v295 = vxor.u32 %v213, 2147483648
    %v296 = vmul.f32 %v295, 1.442695
    %v297 = vpow.pop %v296
    %v298 = vadd.f32 %v297, 1.0
    %v299 = vrcp.pop %v298
    %v300 = vmul.f32 %v298, %v299
    %v301 = vsub.f32 1.0, %v300
    %v302 = vmul.f32 %v299, %v301
    %v303 = vadd.f32 %v299, %v302
    %vm304 = vweird.f32 %v298
    %vm305 = vweird.f32 %v299
    %vm306 = vmor %vm304, %vm305
    %v307 = vsel %vm306, %v299, %v303
    %v308 = vand.u32 2147483647, %v298
    %vm309 = vcmp.eq.f32.partialorder %v308, 8.507059e+37
    %v310 = vand.u32 %v298, 2147483648
    %v311 = vor.u32 1.1754944e-38, %v310
    %v312 = vsel %vm309, %v311, %v307
    %v313 = vmul.f32 1.0, %v312
    %v314 = vxor.u32 %v253, 2147483648
    %v315 = vmul.f32 %v314, 1.442695
    %v316 = vpow.pop %v315
    %v317 = vadd.f32 %v316, 1.0
    %v318 = vrcp.pop %v317
    %v319 = vmul.f32 %v317, %v318
    %v320 = vsub.f32 1.0, %v319
    %v321 = vmul.f32 %v318, %v320
    %v322 = vadd.f32 %v318, %v321
    %vm323 = vweird.f32 %v317
    %vm324 = vweird.f32 %v318
    %vm325 = vmor %vm323, %vm324
    %v326 = vsel %vm325, %v318, %v322
    %v327 = vand.u32 2147483647, %v317
    %vm328 = vcmp.eq.f32.partialorder %v327, 8.507059e+37
    %v329 = vand.u32 %v317, 2147483648
    %v330 = vor.u32 1.1754944e-38, %v329
    %v331 = vsel %vm328, %v330, %v326
    %v332 = vmul.f32 1.0, %v331
    %v333 = vmul.f32 %v332, %v77
    %v334 = vld [vmem:[#allocation8] sm:$0xff]
    %v335 = vld [vmem:[#allocation8 + $0x8] sm:$0xff]
    %v336 = vld [vmem:[#allocation8 + $0x10] sm:$0xff]
    %v337 = vld [vmem:[#allocation8 + $0x18] sm:$0xff]
    %v338 = vld [vmem:[#allocation8 + $0x20] sm:$0xff]
    %v339 = vld [vmem:[#allocation8 + $0x28] sm:$0xff]
    %v340 = vld [vmem:[#allocation8 + $0x30] sm:$0xff]
    %v341 = vld [vmem:[#allocation8 + $0x38] sm:$0xff]
    %v342 = vld [vmem:[#allocation8 + $0x40] sm:$0xff]
    %v343 = vld [vmem:[#allocation8 + $0x48] sm:$0xff]
    %v344 = vld [vmem:[#allocation8 + $0x50] sm:$0xff]
    %v345 = vld [vmem:[#allocation8 + $0x58] sm:$0xff]
    %v346 = vld [vmem:[#allocation8 + $0x60] sm:$0xff]
    %v347 = vld [vmem:[#allocation8 + $0x68] sm:$0xff]
    %v348 = vld [vmem:[#allocation8 + $0x70] sm:$0xff]
    %v349 = vld [vmem:[#allocation8 + $0x78] sm:$0xff]
    %350 = vmatpush.msra.mxu0 %v349
    %351 = vmatpush.msra.mxu0 %v348
    %352 = vmatpush.msra.mxu0 %v347
    %353 = vmatpush.msra.mxu0 %v346
    %354 = vmatpush.msra.mxu0 %v345
    %355 = vmatpush.msra.mxu0 %v344
    %356 = vmatpush.msra.mxu0 %v343
    %357 = vmatpush.msra.mxu0 %v342
    %358 = vmatpush.msra.mxu0 %v341
    %359 = vmatpush.msra.mxu0 %v340
    %360 = vmatpush.msra.mxu0 %v339
    %361 = vmatpush.msra.mxu0 %v338
    %362 = vmatpush.msra.mxu0 %v337
    %363 = vmatpush.msra.mxu0 %v336
    %364 = vmatpush.msra.mxu0 %v335
    %365 = vmatpush.msra.mxu0 %v334
    %366 = vmatmul.f32.gmra.mxu0 %v333
    %v367 = vpop.f32.mrf.mxu0
    %v368 = vadd.f32 0.0, %v367
    %369 = vdwg.mxu0
    %v370 = vadd.f32 %v293, %v368
    %v371 = vtanh.pop %v370
    %v372 = vsub.f32 1.0, %v313
    %v373 = vmul.f32 %v372, %v77
    %v374 = vmul.f32 %v313, %v371
    %v375 = vadd.f32 %v373, %v374
    %376 = vst [vmem:[#allocation10] sm:$0xff] %v375
    // Predicated region
    $region34: #{tpu_custom_call.1} parent=1 // pred_check
      _
    $region35: #{tpu_custom_call.1} parent=1 // pred_check_branch
      %378 = sbr.rel (0) target = $region37
    $region36: #{tpu_custom_call.1} parent=1 // pred_region
      %380 = vsyncadd [#allocation4], 0
      %s382 = sshll.u32 [#allocation10], 4
      %s383 = int_to_ptr.vmem [resolvable:$true] %s382
      %s384 = sshll.u32 %s4, 4
      %s385 = int_to_ptr.hbm [resolvable:$true] %s384
      %387 = dma.vmem_to_hbm [thread:$0]  %s383, 128, %s385, [#allocation4]
    $region37: #{tpu_custom_call.1} parent=1 // pred_fallthru
      _
    // Predicated region
    $region38: #{tpu_custom_call.1} parent=1 // pred_check
      _
    $region39: #{tpu_custom_call.1} parent=1 // pred_check_branch
      %389 = sbr.rel (0) target = $region41
    $region40: #{tpu_custom_call.1} parent=1 // pred_region
      %391 = dma.done [#allocation4], 128
    $region41: #{tpu_custom_call.1} parent=1 // pred_fallthru
      _
    %392 = vsyncpa [#allocation3], 1
    %393 = vsyncpa [#allocation6], 1
    %394 = vsyncpa [#allocation9], 1
    %395 = vsyncpa [#allocation4], 1

</llo_original>
